<compile_context>
chip_gen: v5e
topology: v5e:2x2
jax: 0.10.0
libtpu: 0.0.40
codegen_flags: <defaults>
</compile_context>

<pallas_src>
import functools

import jax
import jax.numpy as jnp
import numpy as np
from jax.experimental import pallas as pl
from jax.experimental.pallas import tpu as pltpu


def _dnll_ce_kernel(x_ref, t_ref, sum_ref, cnt_ref, *, ignore_index):
    # Per-(batch, pixel-chunk) accumulators live in the VMEM-resident output blocks; the
    # output block index is constant along the innermost (pixel-block) axis, so init there.
    @pl.when(pl.program_id(2) == 0)
    def _():
        sum_ref[...] = jnp.zeros_like(sum_ref)
        cnt_ref[...] = jnp.zeros_like(cnt_ref)

    # Stream logits in their native dtype (bf16 in most depth nets); upcast per tile.
    logits = x_ref[0].astype(jnp.float32)      # (C, TP) float32, classes on sublanes
    tgt = t_ref[0]                             # (1, TP) int32 quantized, masked target

    valid = tgt != ignore_index                # (1, TP) bool

    # Per-pixel log-sum-exp over the class (sublane) axis, in f32 for accuracy.
    m_c = jnp.max(logits, axis=0, keepdims=True)                                # (1, TP)
    lse = m_c + jnp.log(jnp.sum(jnp.exp(logits - m_c), axis=0, keepdims=True))  # (1, TP)

    # Gather the target-class logit via a one-hot select (no dynamic gather on TPU).
    # Tiny (C, 1) iota column instead of regenerating a full (C, TP) iota each grid step.
    cls_col = jax.lax.broadcasted_iota(jnp.int32, (logits.shape[0], 1), 0)      # (C, 1)
    onehot = cls_col == tgt                                                     # (C, TP)
    picked = jnp.sum(jnp.where(onehot, logits, 0.0), axis=0, keepdims=True)     # (1, TP)

    ce = jnp.where(valid, lse - picked, 0.0)                                    # (1, TP)

    sum_ref[0] += ce
    cnt_ref[0] += valid.astype(jnp.float32)


def discrete_nll_loss(logits, depth, mask=None, *, min_depth=0.001, max_depth=10.0,
                      depth_bins=64, tile_pixels=None):
    """logits: (N, depth_bins, H, W) float (any float dtype); depth: (N,1,H,W) or (N,H,W);
    mask: optional bool, same spatial shape as depth.  Returns scalar loss."""
    alpha = 1.0
    zeta = 1.0 - min_depth
    beta = max_depth + zeta
    ignore_index = -(depth_bins + 1)

    if depth.ndim == 3:
        depth = depth[:, None]
    if mask is not None:
        if mask.ndim == 3:
            mask = mask[:, None]
        mask = mask.astype(bool)

    N, C, H, W = logits.shape
    assert C == depth_bins, "class dim of logits must equal depth_bins"
    # TODO(synk): bilinear interpolation when logits spatial dims != target spatial dims.
    assert logits.shape[-2:] == depth.shape[-2:], "spatial dims must match (no interpolate)"

    # quantize_depth + target masking (tiny stream: 1/depth_bins of the logits bytes).
    q = jnp.log(depth.astype(jnp.float32) / alpha) / float(np.log(beta / alpha))
    tq = jnp.round(q * (depth_bins - 1)).astype(jnp.int32)
    tq = jnp.clip(tq, 0, depth_bins - 1)          # PyTorch CE would raise on out-of-range
    if mask is not None:
        tq = jnp.where(mask, tq, jnp.int32(ignore_index))

    P = H * W
    # Keep logits in their NATIVE dtype (no wrapper f32 cast); reshape is metadata-only.
    x = logits.reshape(N, C, P)
    t = tq.reshape(N, 1, P)

    # ---- Tiling -------------------------------------------------------------
    # Large lane-dense pixel tiles (~4 MiB logits block -> 8 MiB double-buffered, fits
    # v5e/v6e/v7x).  Pad the pixel axis up to a multiple of the tile instead of searching
    # divisors (which could silently collapse to 128-wide tiles for common H*W).
    itemsize = jnp.dtype(x.dtype).itemsize
    target_block_bytes = 4 * 1024 * 1024
    tp = max(2048, (target_block_bytes // (C * itemsize)) // 128 * 128)
    if tile_pixels is not None:                    # test / tuning override
        tp = max(128, (tile_pixels // 128) * 128)
    p128 = pl.cdiv(P, 128) * 128
    tp = min(tp, p128)

    nb = pl.cdiv(P, tp)
    # Extra 'parallel' pixel-chunk axis so 2-TensorCore chips (v7x) stay busy when the batch
    # alone cannot be split evenly; serializes harmlessly on single-TC chips (v5e/v6e).
    n_par = 2 if (N % 2 == 1 and nb >= 2) else 1
    nb_inner = pl.cdiv(nb, n_par)
    p_pad = n_par * nb_inner * tp

    if p_pad != P:
        x = jnp.pad(x, ((0, 0), (0, 0), (0, p_pad - P)))
        t = jnp.pad(t, ((0, 0), (0, 0), (0, p_pad - P)), constant_values=ignore_index)

    kernel = functools.partial(_dnll_ce_kernel, ignore_index=ignore_index)
    psum, pcnt = pl.pallas_call(
        kernel,
        out_shape=(jax.ShapeDtypeStruct((N * n_par, 1, tp), jnp.float32),
                   jax.ShapeDtypeStruct((N * n_par, 1, tp), jnp.float32)),
        grid_spec=pltpu.PrefetchScalarGridSpec(
            num_scalar_prefetch=0,
            grid=(N, n_par, nb_inner),
            in_specs=[
                # TODO(synk): if profiles still show exposed DMA on very short grids, add
                # pipeline_mode=pl.Buffered(3) to this logits spec.
                pl.BlockSpec((1, C, tp), lambda b, c, j: (b, 0, c * nb_inner + j)),  # logits
                pl.BlockSpec((1, 1, tp), lambda b, c, j: (b, 0, c * nb_inner + j)),  # targets
            ],
            out_specs=[
                pl.BlockSpec((1, 1, tp), lambda b, c, j: (b * n_par + c, 0, 0)),  # partial sums
                pl.BlockSpec((1, 1, tp), lambda b, c, j: (b * n_par + c, 0, 0)),  # valid counts
            ],
        ),
        compiler_params=pltpu.CompilerParams(
            dimension_semantics=("parallel", "parallel", "arbitrary"),
            vmem_limit_bytes=48 * 1024 * 1024),
    )(x, t)

    # CrossEntropyLoss(reduction='mean', ignore_index): sum over valid / count(valid).
    # NOTE: zero valid pixels -> 0/0 = NaN (matches PyTorch mean semantics).
    return jnp.sum(psum) / jnp.sum(pcnt)


def _reference(logits, depth, mask, min_depth=0.001, max_depth=10.0, depth_bins=64):
    """Pure-JAX (non-Pallas) reference mirroring the PyTorch module."""
    alpha = 1.0
    beta = max_depth + (1.0 - min_depth)
    ignore_index = -(depth_bins + 1)

    q = jnp.log(depth.astype(jnp.float32) / alpha) / float(np.log(beta / alpha))
    t = jnp.round(q * (depth_bins - 1)).astype(jnp.int32)
    m = mask.astype(jnp.int32)
    t = t * m + (1 - m) * ignore_index

    N, C, H, W = logits.shape
    lg = logits.astype(jnp.float32).reshape(N, C, H * W)
    tg = t.reshape(N, H * W)

    logp = jax.nn.log_softmax(lg, axis=1)
    valid = tg != ignore_index
    safe = jnp.clip(tg, 0, C - 1)
    picked = jnp.take_along_axis(logp, safe[:, None, :], axis=1)[:, 0, :]
    losses = jnp.where(valid, -picked, 0.0)
    return losses.sum() / valid.sum().astype(jnp.float32)


if __name__ == "__main__":
    key = jax.random.PRNGKey(0)
    k1, k2, k3 = jax.random.split(key, 3)

    B, BINS, H, W = 2, 64, 16, 16
    logits = jax.random.normal(k1, (B, BINS, H, W), jnp.float32)
    # depth in [1, max_depth] so quantized bins land in [0, depth_bins-1]
    depth = jax.random.uniform(k2, (B, 1, H, W), jnp.float32, minval=1.0, maxval=10.0)
    mask = jax.random.uniform(k3, (B, 1, H, W), jnp.float32) > 0.2

    # f32 logits path
    loss = jax.block_until_ready(discrete_nll_loss(logits, depth, mask))
    ref = _reference(logits, depth, mask)
    np.testing.assert_allclose(np.asarray(loss), np.asarray(ref), rtol=1e-4, atol=1e-4)

    # bf16 logits path: streamed as bf16, upcast per tile inside the kernel.
    logits_bf16 = logits.astype(jnp.bfloat16)
    loss_bf = jax.block_until_ready(discrete_nll_loss(logits_bf16, depth, mask))
    ref_bf = _reference(logits_bf16, depth, mask)
    np.testing.assert_allclose(np.asarray(loss_bf), np.asarray(ref_bf), rtol=1e-3, atol=1e-3)

    # N == 1 with a forced small tile to exercise the extra 'parallel' pixel-chunk axis.
    loss_1 = jax.block_until_ready(
        discrete_nll_loss(logits[:1], depth[:1], mask[:1], tile_pixels=128))
    ref_1 = _reference(logits[:1], depth[:1], mask[:1])
    np.testing.assert_allclose(np.asarray(loss_1), np.asarray(ref_1), rtol=1e-4, atol=1e-4)

    print("KERNEL_OK")
</pallas_src>

<mosaic_0001>
module attributes {stable_mosaic.version = 11 : i64} {
  func.func @_dnll_ce_kernel(%arg0: i32, %arg1: i32, %arg2: i32, %arg3: memref<1x64x256xf32, #tpu.memory_space<vmem>>, %arg4: memref<1x1x256xi32, #tpu.memory_space<vmem>>, %arg5: memref<1x1x256xf32, #tpu.memory_space<vmem>>, %arg6: memref<1x1x256xf32, #tpu.memory_space<vmem>>) attributes {dimension_semantics = [#tpu.dimension_semantics<parallel>, #tpu.dimension_semantics<parallel>, #tpu.dimension_semantics<arbitrary>], iteration_bounds = array<i64: 2, 1, 1>, scalar_prefetch = 0 : i64, scratch_operands = 0 : i64, tpu.core_type = #tpu.core_type<tc>, window_params = [{transform_indices = @transform_0, window_bounds = array<i64: 1, 64, 256>}, {transform_indices = @transform_1, window_bounds = array<i64: 1, 1, 256>}, {transform_indices = @transform_2, window_bounds = array<i64: 1, 1, 256>}, {transform_indices = @transform_3, window_bounds = array<i64: 1, 1, 256>}]} {
    %c0_i32 = arith.constant 0 : i32
    %0 = arith.cmpi eq, %arg2, %c0_i32 : i32
    %1 = arith.extui %0 : i1 to i32
    %c0_i32_0 = arith.constant 0 : i32
    %2 = arith.cmpi ne, %1, %c0_i32_0 : i32
    scf.if %2 {
      %cst_22 = arith.constant 0.000000e+00 : f32
      %43 = vector.broadcast %cst_22 : f32 to vector<1x1x256xf32>
      %c0_23 = arith.constant 0 : index
      %c0_24 = arith.constant 0 : index
      %c0_25 = arith.constant 0 : index
      %44 = vector.load %arg5[%c0_23, %c0_24, %c0_25] : memref<1x1x256xf32, #tpu.memory_space<vmem>>, vector<1x1x256xf32>
      tpu.vector_store %arg5[%c0_23, %c0_24, %c0_25], %43 {strides = array<i32>} : memref<1x1x256xf32, #tpu.memory_space<vmem>>, vector<1x1x256xf32>,
      %cst_26 = arith.constant 0.000000e+00 : f32
      %45 = vector.broadcast %cst_26 : f32 to vector<1x1x256xf32>
      %c0_27 = arith.constant 0 : index
      %c0_28 = arith.constant 0 : index
      %c0_29 = arith.constant 0 : index
      %46 = vector.load %arg6[%c0_27, %c0_28, %c0_29] : memref<1x1x256xf32, #tpu.memory_space<vmem>>, vector<1x1x256xf32>
      tpu.vector_store %arg6[%c0_27, %c0_28, %c0_29], %45 {strides = array<i32>} : memref<1x1x256xf32, #tpu.memory_space<vmem>>, vector<1x1x256xf32>,
    } else {
    }
    %c0 = arith.constant 0 : index
    %c0_1 = arith.constant 0 : index
    %c0_2 = arith.constant 0 : index
    %3 = vector.load %arg3[%c0, %c0_1, %c0_2] : memref<1x64x256xf32, #tpu.memory_space<vmem>>, vector<1x64x256xf32>
    %4 = vector.shape_cast %3 : vector<1x64x256xf32> to vector<64x256xf32>
    %c0_3 = arith.constant 0 : index
    %c0_4 = arith.constant 0 : index
    %c0_5 = arith.constant 0 : index
    %5 = vector.load %arg4[%c0_3, %c0_4, %c0_5] : memref<1x1x256xi32, #tpu.memory_space<vmem>>, vector<1x1x256xi32>
    %6 = vector.shape_cast %5 : vector<1x1x256xi32> to vector<1x256xi32>
    %c-65_i32 = arith.constant -65 : i32
    %7 = vector.broadcast %c-65_i32 : i32 to vector<1x256xi32>
    %8 = arith.cmpi ne, %6, %7 : vector<1x256xi32>
    %cst = arith.constant dense<0xFF800000> : vector<256xf32>
    %9 = vector.multi_reduction <maximumf>, %4, %cst [0] : vector<64x256xf32> to vector<256xf32>
    %10 = vector.shape_cast %9 : vector<256xf32> to vector<1x256xf32>
    %11 = vector.broadcast %10 : vector<1x256xf32> to vector<64x256xf32>
    %12 = arith.subf %4, %11 : vector<64x256xf32>
    %13 = math.exp %12 : vector<64x256xf32>
    %cst_6 = arith.constant dense<0.000000e+00> : vector<256xf32>
    %14 = vector.multi_reduction <add>, %13, %cst_6 [0] : vector<64x256xf32> to vector<256xf32>
    %15 = vector.shape_cast %14 : vector<256xf32> to vector<1x256xf32>
    %16 = math.log %15 : vector<1x256xf32>
    %17 = arith.addf %10, %16 : vector<1x256xf32>
    %18 = tpu.iota {dimensions = array<i32: 0>} : vector<64x1xi32>
    %19 = vector.broadcast %18 : vector<64x1xi32> to vector<64x256xi32>
    %20 = vector.broadcast %6 : vector<1x256xi32> to vector<64x256xi32>
    %21 = arith.cmpi eq, %19, %20 : vector<64x256xi32>
    %cst_7 = arith.constant 0.000000e+00 : f32
    %22 = vector.broadcast %cst_7 : f32 to vector<64x256xf32>
    %23 = arith.select %21, %4, %22 : vector<64x256xi1>, vector<64x256xf32>
    %cst_8 = arith.constant dense<0.000000e+00> : vector<256xf32>
    %24 = vector.multi_reduction <add>, %23, %cst_8 [0] : vector<64x256xf32> to vector<256xf32>
    %25 = vector.shape_cast %24 : vector<256xf32> to vector<1x256xf32>
    %26 = arith.subf %17, %25 : vector<1x256xf32>
    %cst_9 = arith.constant 0.000000e+00 : f32
    %27 = vector.broadcast %cst_9 : f32 to vector<1x256xf32>
    %28 = arith.select %8, %26, %27 : vector<1x256xi1>, vector<1x256xf32>
    %c0_10 = arith.constant 0 : index
    %c0_11 = arith.constant 0 : index
    %c0_12 = arith.constant 0 : index
    %29 = vector.load %arg5[%c0_10, %c0_11, %c0_12] : memref<1x1x256xf32, #tpu.memory_space<vmem>>, vector<1x1x256xf32>
    %30 = vector.shape_cast %29 : vector<1x1x256xf32> to vector<1x256xf32>
    %31 = arith.addf %30, %28 : vector<1x256xf32>
    %c0_13 = arith.constant 0 : index
    %c0_14 = arith.constant 0 : index
    %c0_15 = arith.constant 0 : index
    %32 = vector.load %arg5[%c0_13, %c0_14, %c0_15] : memref<1x1x256xf32, #tpu.memory_space<vmem>>, vector<1x1x256xf32>
    %33 = vector.shape_cast %32 : vector<1x1x256xf32> to vector<1x256xf32>
    %34 = vector.shape_cast %31 : vector<1x256xf32> to vector<1x1x256xf32>
    tpu.vector_store %arg5[%c0_13, %c0_14, %c0_15], %34 {strides = array<i32>} : memref<1x1x256xf32, #tpu.memory_space<vmem>>, vector<1x1x256xf32>,
    %c0_16 = arith.constant 0 : index
    %c0_17 = arith.constant 0 : index
    %c0_18 = arith.constant 0 : index
    %35 = vector.load %arg6[%c0_16, %c0_17, %c0_18] : memref<1x1x256xf32, #tpu.memory_space<vmem>>, vector<1x1x256xf32>
    %36 = vector.shape_cast %35 : vector<1x1x256xf32> to vector<1x256xf32>
    %37 = arith.extui %8 : vector<1x256xi1> to vector<1x256xi32>
    %38 = arith.sitofp %37 : vector<1x256xi32> to vector<1x256xf32>
    %39 = arith.addf %36, %38 : vector<1x256xf32>
    %c0_19 = arith.constant 0 : index
    %c0_20 = arith.constant 0 : index
    %c0_21 = arith.constant 0 : index
    %40 = vector.load %arg6[%c0_19, %c0_20, %c0_21] : memref<1x1x256xf32, #tpu.memory_space<vmem>>, vector<1x1x256xf32>
    %41 = vector.shape_cast %40 : vector<1x1x256xf32> to vector<1x256xf32>
    %42 = vector.shape_cast %39 : vector<1x256xf32> to vector<1x1x256xf32>
    tpu.vector_store %arg6[%c0_19, %c0_20, %c0_21], %42 {strides = array<i32>} : memref<1x1x256xf32, #tpu.memory_space<vmem>>, vector<1x1x256xf32>,
    return
  }
  func.func @transform_0(%arg0: i32, %arg1: i32, %arg2: i32) -> (i32, i32, i32) {
    %c1_i32 = arith.constant 1 : i32
    %0 = arith.muli %arg1, %c1_i32 : i32
    %1 = arith.addi %0, %arg2 : i32
    %c0_i32 = arith.constant 0 : i32
    %c0_i32_0 = arith.constant 0 : i32
    return %arg0, %c0_i32, %1 : i32, i32, i32
  }
  func.func @transform_1(%arg0: i32, %arg1: i32, %arg2: i32) -> (i32, i32, i32) {
    %c1_i32 = arith.constant 1 : i32
    %0 = arith.muli %arg1, %c1_i32 : i32
    %1 = arith.addi %0, %arg2 : i32
    %c0_i32 = arith.constant 0 : i32
    %c0_i32_0 = arith.constant 0 : i32
    return %arg0, %c0_i32, %1 : i32, i32, i32
  }
  func.func @transform_2(%arg0: i32, %arg1: i32, %arg2: i32) -> (i32, i32, i32) {
    %c1_i32 = arith.constant 1 : i32
    %0 = arith.muli %arg0, %c1_i32 : i32
    %1 = arith.addi %0, %arg1 : i32
    %c0_i32 = arith.constant 0 : i32
    %c0_i32_0 = arith.constant 0 : i32
    %c0_i32_1 = arith.constant 0 : i32
    return %1, %c0_i32, %c0_i32_0 : i32, i32, i32
  }
  func.func @transform_3(%arg0: i32, %arg1: i32, %arg2: i32) -> (i32, i32, i32) {
    %c1_i32 = arith.constant 1 : i32
    %0 = arith.muli %arg0, %c1_i32 : i32
    %1 = arith.addi %0, %arg1 : i32
    %c0_i32 = arith.constant 0 : i32
    %c0_i32_0 = arith.constant 0 : i32
    %c0_i32_1 = arith.constant 0 : i32
    return %1, %c0_i32, %c0_i32_0 : i32, i32, i32
  }
}

</mosaic_0001>

<llo_original>
// kernel: tpu_custom_call.1
$region0: #{tpu_custom_call.1}
  #allocation0 [shape = 'u32[]', space=smem, size = 0x4, offset = 0x4, fixed_abs, tag = 'smem constant byte address 0x4 - core index']
  #allocation1 [shape = 'u32[72,128]{1,0:T(1,128)}', space=vmem, size = 0x9000, scoped, tag = 'internal scratch']
  %s0 = inlined_call_operand.hbm [shape: f32[2,64,256], index: 0, kind: input, shape index: {}]
  %s1 = inlined_call_operand.hbm [shape: s32[2,1,256], index: 1, kind: input, shape index: {}]
  %s2 = inlined_call_operand.hbm [shape: f32[2,1,256], index: 2, kind: output, shape index: {0}]
  %s3 = inlined_call_operand.hbm [shape: f32[2,1,256], index: 3, kind: output, shape index: {1}]
  %4 = xla_tuple %s2, %s3
  %s5 = sld [smem:[#allocation0]]
  $region61: #{tpu_custom_call.1} parent=0
    _
  %s7 = ssub.s32 1, %s5
  %s8 = scalar_select 0, %s7, %s5
  $region1: #{tpu_custom_call.1} parent=0
    #allocation2 [shape = 'u8[131072]{0}', space=vmem, size = 0x20000, scoped, tag = 'input window, operand 0']
    #allocation3 [shape = 's32[2]{0}', space=sflag, size = 0x8, scoped, tag = 'scoped memory for tpu_custom_call.1']
    #allocation4 [shape = 's32[2]{0}', space=sflag, size = 0x8, scoped, tag = 'scoped memory for tpu_custom_call.1']
    #allocation5 [shape = 'u8[2048]{0}', space=vmem, size = 0x800, scoped, tag = 'input window, operand 1']
    #allocation6 [shape = 's32[2]{0}', space=sflag, size = 0x8, scoped, tag = 'scoped memory for tpu_custom_call.1']
    #allocation7 [shape = 'u8[2048]{0}', space=vmem, size = 0x800, scoped, tag = 'output window, operand 0']
    #allocation8 [shape = 'u8[2048]{0}', space=vmem, size = 0x800, scoped, tag = 'output window, operand 1']
    #allocation9 [shape = 's32[2]{0}', space=sflag, size = 0x8, scoped, tag = 'scoped memory for tpu_custom_call.1']
    %9 = vsyncpa [#allocation3], 0
    %s10 = scalar_lea.sflag [#allocation3], 1
    %11 = vsyncpa %s10, 0
    %12 = vsyncpa [#allocation6], 0
    %s13 = scalar_lea.sflag [#allocation6], 1
    %14 = vsyncpa %s13, 0
    %15 = vsyncpa [#allocation4], 0
    %s16 = scalar_lea.sflag [#allocation4], 1
    %17 = vsyncpa %s16, 0
    %18 = vsyncpa [#allocation9], 0
    %s19 = scalar_lea.sflag [#allocation9], 1
    %20 = vsyncpa %s19, 0
    loop: start=0, step=1, limit=4
    $region2: #{tpu_custom_call.1} parent=1 // loop_pre_header
      _
    $region3: #{tpu_custom_call.1} parent=1 // loop_header
      %s22 = sphi 0, %s26
      %p23 = scmp.ge.s32.totalorder %s22, 4
      %s29 = sphi 0, %s48
      %s30 = sphi 0, %s44
      %s31 = sphi 0, %s40
      %s32 = sphi 0, %s29
      %s33 = sphi 0, %s30
      %s34 = sphi 0, %s31
      %s35 = sphi 0, %s32
      %s36 = sphi 0, %s33
      %s37 = sphi 0, %s34
      %s55 = sphi 0, %s57
      %s58 = sphi 0, %s55
      %s59 = sphi 0, %s58
      %s75 = sphi 0, %s59
      %s85 = sphi 0, %s87
      %s88 = sphi 0, %s85
      %s89 = sphi 0, %s88
      %s105 = sphi 0, %s89
      %s113 = sphi 0, %s115
      %s116 = sphi 0, %s113
      %s117 = sphi 0, %s116
      %s133 = sphi 0, %s117
      %s141 = sphi 0, %s143
      %s144 = sphi 0, %s141
      %s145 = sphi 0, %s144
      %s161 = sphi 0, %s145
    $region4: #{tpu_custom_call.1} parent=1 // loop_header_branch
      %25 = sbr.rel (%p23) target = $region8
    $region5: #{tpu_custom_call.1} parent=1 // loop_body
      %s27 = ssub.s32 %s22, 1
      %s28 = ssub.s32 %s22, 2
      %s38 = sadd.s32 1, %s31
      %p39 = scmp.ge.s32.totalorder %s38, 1
      %s40 = scalar_select %p39, 0, %s38
      %s41 = sadd.s32 1, %s30
      %s42 = scalar_select %p39, %s41, %s30
      %p43 = scmp.ge.s32.totalorder %s42, 1
      %s44 = scalar_select %p43, 0, %s42
      %s45 = sadd.s32 1, %s29
      %s46 = scalar_select %p43, %s45, %s29
      %p47 = scmp.ge.s32.totalorder %s46, 2
      %s48 = scalar_select %p47, 0, %s46
      %s49 = sadd.s32 %s30, %s31
      %s50 = sadd.s32 %s44, %s40
      %s51 = ssub.s32 %s29, %s48
      %s52 = ssub.s32 %s49, %s50
      %s53 = sor.u32 %s51, %s52
      %p54 = scmp.eq.s32.totalorder %s53, 0
      %s56 = sadd.s32 %s55, 1
      %s57 = scalar_select %p54, %s55, %s56
      %p60 = pneg %p54
      %p61 = scmp.eq.s32.totalorder %s22, 1
      %p62 = por %p60, %p61
      %p63 = scmp.ne.s32.totalorder %s55, %s58
      %p64 = scmp.eq.s32.totalorder %s22, 0
      %p65 = por %p63, %p64
      %p66 = scmp.ne.s32.totalorder %s55, %s58
      %p67 = scmp.eq.s32.totalorder %s27, 1
      %p68 = por %p66, %p67
      %p69 = scmp.ne.s32.totalorder %s58, %s59
      %p70 = scmp.eq.s32.totalorder %s27, 0
      %p71 = por %p69, %p70
      %p72 = scmp.ne.s32.totalorder %s58, %s59
      %p73 = scmp.eq.s32.totalorder %s28, 1
      %p74 = por %p72, %p73
      %p76 = scmp.ne.s32.totalorder %s59, %s75
      %p77 = scmp.eq.s32.totalorder %s28, 0
      %p78 = por %p76, %p77
      %s79 = sadd.s32 %s30, %s31
      %s80 = sadd.s32 %s44, %s40
      %s81 = ssub.s32 %s29, %s48
      %s82 = ssub.s32 %s79, %s80
      %s83 = sor.u32 %s81, %s82
      %p84 = scmp.eq.s32.totalorder %s83, 0
      %s86 = sadd.s32 %s85, 1
      %s87 = scalar_select %p84, %s85, %s86
      %p90 = pneg %p84
      %p91 = scmp.eq.s32.totalorder %s22, 1
      %p92 = por %p90, %p91
      %p93 = scmp.ne.s32.totalorder %s85, %s88
      %p94 = scmp.eq.s32.totalorder %s22, 0
      %p95 = por %p93, %p94
      %p96 = scmp.ne.s32.totalorder %s85, %s88
      %p97 = scmp.eq.s32.totalorder %s27, 1
      %p98 = por %p96, %p97
      %p99 = scmp.ne.s32.totalorder %s88, %s89
      %p100 = scmp.eq.s32.totalorder %s27, 0
      %p101 = por %p99, %p100
      %p102 = scmp.ne.s32.totalorder %s88, %s89
      %p103 = scmp.eq.s32.totalorder %s28, 1
      %p104 = por %p102, %p103
      %p106 = scmp.ne.s32.totalorder %s89, %s105
      %p107 = scmp.eq.s32.totalorder %s28, 0
      %p108 = por %p106, %p107
      %s109 = sadd.s32 %s29, %s30
      %s110 = sadd.s32 %s48, %s44
      %s111 = ssub.s32 %s109, %s110
      %p112 = scmp.eq.s32.totalorder %s111, 0
      %s114 = sadd.s32 %s113, 1
      %s115 = scalar_select %p112, %s113, %s114
      %p118 = pneg %p112
      %p119 = scmp.eq.s32.totalorder %s22, 1
      %p120 = por %p118, %p119
      %p121 = scmp.ne.s32.totalorder %s113, %s116
      %p122 = scmp.eq.s32.totalorder %s22, 0
      %p123 = por %p121, %p122
      %p124 = scmp.ne.s32.totalorder %s113, %s116
      %p125 = scmp.eq.s32.totalorder %s27, 1
      %p126 = por %p124, %p125
      %p127 = scmp.ne.s32.totalorder %s116, %s117
      %p128 = scmp.eq.s32.totalorder %s27, 0
      %p129 = por %p127, %p128
      %p130 = scmp.ne.s32.totalorder %s116, %s117
      %p131 = scmp.eq.s32.totalorder %s28, 1
      %p132 = por %p130, %p131
      %p134 = scmp.ne.s32.totalorder %s117, %s133
      %p135 = scmp.eq.s32.totalorder %s28, 0
      %p136 = por %p134, %p135
      %s137 = sadd.s32 %s29, %s30
      %s138 = sadd.s32 %s48, %s44
      %s139 = ssub.s32 %s137, %s138
      %p140 = scmp.eq.s32.totalorder %s139, 0
      %s142 = sadd.s32 %s141, 1
      %s143 = scalar_select %p140, %s141, %s142
      %p146 = pneg %p140
      %p147 = scmp.eq.s32.totalorder %s22, 1
      %p148 = por %p146, %p147
      %p149 = scmp.ne.s32.totalorder %s141, %s144
      %p150 = scmp.eq.s32.totalorder %s22, 0
      %p151 = por %p149, %p150
      %p152 = scmp.ne.s32.totalorder %s141, %s144
      %p153 = scmp.eq.s32.totalorder %s27, 1
      %p154 = por %p152, %p153
      %p155 = scmp.ne.s32.totalorder %s144, %s145
      %p156 = scmp.eq.s32.totalorder %s27, 0
      %p157 = por %p155, %p156
      %p158 = scmp.ne.s32.totalorder %s144, %s145
      %p159 = scmp.eq.s32.totalorder %s28, 1
      %p160 = por %p158, %p159
      %p162 = scmp.ne.s32.totalorder %s145, %s161
      %p163 = scmp.eq.s32.totalorder %s28, 0
      %p164 = por %p162, %p163
      %p165 = scmp.le.s32.totalorder 1, %s22
      %p166 = scmp.lt.s32.totalorder %s22, 3
      %p167 = pnand %p165, %p166
      %p168 = pneg %p167
      // Predicated region
      $region9: #{tpu_custom_call.1} parent=5 // pred_check
        _
      $region10: #{tpu_custom_call.1} parent=5 // pred_check_branch
        %170 = sbr.rel (%p167) target = $region12
      $region11: #{tpu_custom_call.1} parent=5 // pred_region
        %s171 = ssub.s32 %s22, 1
      $region12: #{tpu_custom_call.1} parent=5 // pred_fallthru
        _
      %p172 = scmp.lt.s32.totalorder %s22, 2
      // Predicated region
      $region13: #{tpu_custom_call.1} parent=5 // pred_check
        %p173 = pneg %p172
      $region14: #{tpu_custom_call.1} parent=5 // pred_check_branch
        %175 = sbr.rel (%p173) target = $region16
      $region15: #{tpu_custom_call.1} parent=5 // pred_region
        // Predicated region
        $region17: #{tpu_custom_call.1} parent=15 // pred_check
          %p176 = pneg %p65
        $region18: #{tpu_custom_call.1} parent=15 // pred_check_branch
          %178 = sbr.rel (%p176) target = $region20
        $region19: #{tpu_custom_call.1} parent=15 // pred_region
          %s179 = sand.u32 %s55, 1
          %s180 = scalar_lea.sflag [#allocation3], %s179
          %s181 = sand.u32 %s55, 1
          %s182 = smul.addr %s181, 128
          %s183 = scalar_lea.vmem [#allocation2], %s182
          %s184 = sadd.s32 %s30, %s31
          %s185 = smul.u32 2, %s184
          %187 = vsyncadd %s180, 0
          %s188 = smul.addr %s29, 16
          %s189 = sadd.s32 %s185, %s188
          %s190 = smul.addr %s189, 8
          %s191 = scalar_lea.hbm %s0, %s190
          %s192 = sshll.u32 %s191, 4
          %s193 = int_to_ptr.hbm [resolvable:$true] %s192
          %s194 = sshll.u32 %s183, 4
          %s195 = int_to_ptr.vmem [resolvable:$true] %s194
          %200 = dma.hbm_to_vmem [thread:$0]  %s193, 2048, %s195, %s180, 256, 256, 16
        $region20: #{tpu_custom_call.1} parent=15 // pred_fallthru
          _
        // Predicated region
        $region21: #{tpu_custom_call.1} parent=15 // pred_check
          %p201 = pneg %p95
        $region22: #{tpu_custom_call.1} parent=15 // pred_check_branch
          %203 = sbr.rel (%p201) target = $region24
        $region23: #{tpu_custom_call.1} parent=15 // pred_region
          %s204 = sand.u32 %s85, 1
          %s205 = scalar_lea.sflag [#allocation6], %s204
          %s206 = sand.u32 %s85, 1
          %s207 = smul.addr %s206, 2
          %s208 = scalar_lea.vmem [#allocation5], %s207
          %s209 = sadd.s32 %s30, %s31
          %s210 = smul.u32 2, %s209
          %212 = vsyncadd %s205, 0
          %s213 = smul.addr %s29, 2
          %s214 = sadd.s32 %s210, %s213
          %s215 = scalar_lea.hbm %s1, %s214
          %s217 = sshll.u32 %s215, 4
          %s218 = int_to_ptr.hbm [resolvable:$true] %s217
          %s219 = sshll.u32 %s208, 4
          %s220 = int_to_ptr.vmem [resolvable:$true] %s219
          %222 = dma.hbm_to_vmem [thread:$0]  %s218, 32, %s220, %s205
        $region24: #{tpu_custom_call.1} parent=15 // pred_fallthru
          _
      $region16: #{tpu_custom_call.1} parent=5 // pred_fallthru
        _
      %p223 = scmp.le.s32.totalorder 1, %s22
      %p224 = scmp.lt.s32.totalorder %s22, 3
      %p225 = pnand %p223, %p224
      %p226 = pneg %p225
      // Predicated region
      $region25: #{tpu_custom_call.1} parent=5 // pred_check
        _
      $region26: #{tpu_custom_call.1} parent=5 // pred_check_branch
        %228 = sbr.rel (%p225) target = $region28
      $region27: #{tpu_custom_call.1} parent=5 // pred_region
        %s229 = ssub.s32 %s22, 1
        %s230 = sand.u32 %s58, 1
        %s231 = scalar_lea.sflag [#allocation3], %s230
        %s232 = sand.u32 %s58, 1
        %s233 = smul.addr %s232, 128
        %s234 = scalar_lea.vmem [#allocation2], %s233
        // Predicated region
        $region29: #{tpu_custom_call.1} parent=27 // pred_check
          %p235 = pneg %p71
        $region30: #{tpu_custom_call.1} parent=27 // pred_check_branch
          %237 = sbr.rel (%p235) target = $region32
        $region31: #{tpu_custom_call.1} parent=27 // pred_region
          %239 = dma.done %s231, 2048
        $region32: #{tpu_custom_call.1} parent=27 // pred_fallthru
          _
        %s240 = sand.u32 %s88, 1
        %s241 = scalar_lea.sflag [#allocation6], %s240
        %s242 = sand.u32 %s88, 1
        %s243 = smul.addr %s242, 2
        %s244 = scalar_lea.vmem [#allocation5], %s243
        // Predicated region
        $region33: #{tpu_custom_call.1} parent=27 // pred_check
          %p245 = pneg %p101
        $region34: #{tpu_custom_call.1} parent=27 // pred_check_branch
          %247 = sbr.rel (%p245) target = $region36
        $region35: #{tpu_custom_call.1} parent=27 // pred_region
          %249 = dma.done %s241, 32
        $region36: #{tpu_custom_call.1} parent=27 // pred_fallthru
          _
        %s250 = sand.u32 %s58, 1
        %s251 = scalar_lea.sflag [#allocation3], %s250
        %s252 = sand.u32 %s58, 1
        %s253 = smul.addr %s252, 128
        %s254 = scalar_lea.vmem [#allocation2], %s253
        %p255 = pneg %p71
        %p256 = pneg %p68
        %s257 = sand.u32 %s88, 1
        %s258 = scalar_lea.sflag [#allocation6], %s257
        %s259 = sand.u32 %s88, 1
        %s260 = smul.addr %s259, 2
        %s261 = scalar_lea.vmem [#allocation5], %s260
        %p262 = pneg %p101
        %p263 = pneg %p98
        %p264 = pneg %p129
        %p265 = pneg %p126
        %s266 = sand.u32 %s116, 1
        %s267 = scalar_lea.sflag [#allocation4], %s266
        %s268 = sand.u32 %s116, 1
        %s269 = smul.addr %s268, 2
        %s270 = scalar_lea.vmem [#allocation7], %s269
        %p271 = pneg %p157
        %p272 = pneg %p154
        %s273 = sand.u32 %s144, 1
        %s274 = scalar_lea.sflag [#allocation9], %s273
        %s275 = sand.u32 %s144, 1
        %s276 = smul.addr %s275, 2
        %s277 = scalar_lea.vmem [#allocation8], %s276
        %s278 = sadd.s32 %s33, %s34
        %s279 = smul.u32 2, %s278
        %s280 = sadd.s32 %s33, %s34
        %s281 = smul.u32 2, %s280
        %s282 = sadd.s32 %s32, %s33
        %s283 = sadd.s32 %s32, %s33
        %p284 = scmp.eq.s32.totalorder %s34, 0
        // Predicated region
        $region37: #{tpu_custom_call.1} parent=27 // pred_check
          %p285 = pneg %p284
        $region38: #{tpu_custom_call.1} parent=27 // pred_check_branch
          %287 = sbr.rel (%p285) target = $region40
        $region39: #{tpu_custom_call.1} parent=27 // pred_region
          %v288 = vlaneseq
          %vm289 = vcmp.ge.s32.totalorder %v288, 0
          %vm290 = vcmp.lt.s32.totalorder %v288, 256
          %vm291 = vmand %vm289, %vm290
          %292 = vst.msk [vmem:[%s270] sm:$0x3] %vm291, 0.0
          %293 = vst.msk [vmem:[%s277] sm:$0x3] %vm291, 0.0
        $region40: #{tpu_custom_call.1} parent=27 // pred_fallthru
          _
        %v294 = vld [vmem:[%s234] sm:$0xff]
        %v295 = vld [vmem:[%s234 + $0x8] sm:$0xff]
        %v296 = vld [vmem:[%s234 + $0x10] sm:$0xff]
        %v297 = vld [vmem:[%s234 + $0x18] sm:$0xff]
        %v298 = vld [vmem:[%s234 + $0x20] sm:$0xff]
        %v299 = vld [vmem:[%s234 + $0x28] sm:$0xff]
        %v300 = vld [vmem:[%s234 + $0x30] sm:$0xff]
        %v301 = vld [vmem:[%s234 + $0x38] sm:$0xff]
        %v302 = vld [vmem:[%s234 + $0x40] sm:$0xff]
        %v303 = vld [vmem:[%s234 + $0x48] sm:$0xff]
        %v304 = vld [vmem:[%s234 + $0x50] sm:$0xff]
        %v305 = vld [vmem:[%s234 + $0x58] sm:$0xff]
        %v306 = vld [vmem:[%s234 + $0x60] sm:$0xff]
        %v307 = vld [vmem:[%s234 + $0x68] sm:$0xff]
        %v308 = vld [vmem:[%s234 + $0x70] sm:$0xff]
        %v309 = vld [vmem:[%s234 + $0x78] sm:$0xff]
        %v310 = vld [vmem:[%s244] sm:$0x3]
        %vm311 = vcmp.ne.s32.totalorder %v310, 4294967231
        %v312 = vmax.f32 %v294, %v298
        %v313 = vmax.f32 %v296, %v300
        %v314 = vmax.f32 %v312, %v302
        %v315 = vmax.f32 %v313, %v304
        %v316 = vmax.f32 %v314, %v306
        %v317 = vmax.f32 %v315, %v308
        %v318 = vmax.f32 %v316, %v317
        %v319 = vrot.slane %v318, 4
        %v320 = vmax.f32 %v318, %v319
        %v321 = vrot.slane %v320, 2
        %v322 = vmax.f32 %v320, %v321
        %v323 = vrot.slane %v322, 1
        %v324 = vmax.f32 %v322, %v323
        %v325 = vmax.f32 %v295, %v299
        %v326 = vmax.f32 %v297, %v301
        %v327 = vmax.f32 %v325, %v303
        %v328 = vmax.f32 %v326, %v305
        %v329 = vmax.f32 %v327, %v307
        %v330 = vmax.f32 %v328, %v309
        %v331 = vmax.f32 %v329, %v330
        %v332 = vrot.slane %v331, 4
        %v333 = vmax.f32 %v331, %v332
        %v334 = vrot.slane %v333, 2
        %v335 = vmax.f32 %v333, %v334
        %v336 = vrot.slane %v335, 1
        %v337 = vmax.f32 %v335, %v336
        %v338 = vsub.f32 %v294, %v324
        %v339 = vsub.f32 %v295, %v337
        %v340 = vsub.f32 %v296, %v324
        %v341 = vsub.f32 %v297, %v337
        %v342 = vsub.f32 %v298, %v324
        %v343 = vsub.f32 %v299, %v337
        %v344 = vsub.f32 %v300, %v324
        %v345 = vsub.f32 %v301, %v337
        %v346 = vsub.f32 %v302, %v324
        %v347 = vsub.f32 %v303, %v337
        %v348 = vsub.f32 %v304, %v324
        %v349 = vsub.f32 %v305, %v337
        %v350 = vsub.f32 %v306, %v324
        %v351 = vsub.f32 %v307, %v337
        %v352 = vsub.f32 %v308, %v324
        %v353 = vsub.f32 %v309, %v337
        %v354 = vmul.f32 %v338, 1.442695
        %v355 = vpow.pop %v354
        %v356 = vmul.f32 %v339, 1.442695
        %v357 = vpow.pop %v356
        %v358 = vmul.f32 %v340, 1.442695
        %v359 = vpow.pop %v358
        %v360 = vmul.f32 %v341, 1.442695
        %v361 = vpow.pop %v360
        %v362 = vmul.f32 %v342, 1.442695
        %v363 = vpow.pop %v362
        %v364 = vmul.f32 %v343, 1.442695
        %v365 = vpow.pop %v364
        %v366 = vmul.f32 %v344, 1.442695
        %v367 = vpow.pop %v366
        %v368 = vmul.f32 %v345, 1.442695
        %v369 = vpow.pop %v368
        %v370 = vmul.f32 %v346, 1.442695
        %v371 = vpow.pop %v370
        %v372 = vmul.f32 %v347, 1.442695
        %v373 = vpow.pop %v372
        %v374 = vmul.f32 %v348, 1.442695
        %v375 = vpow.pop %v374
        %v376 = vmul.f32 %v349, 1.442695
        %v377 = vpow.pop %v376
        %v378 = vmul.f32 %v350, 1.442695
        %v379 = vpow.pop %v378
        %v380 = vmul.f32 %v351, 1.442695
        %v381 = vpow.pop %v380
        %v382 = vmul.f32 %v352, 1.442695
        %v383 = vpow.pop %v382
        %v384 = vmul.f32 %v353, 1.442695
        %v385 = vpow.pop %v384
        %v386 = vadd.f32 %v355, %v359
        %v387 = vadd.f32 %v386, %v363
        %v388 = vadd.f32 %v387, %v367
        %v389 = vadd.f32 %v388, %v371
        %v390 = vadd.f32 %v389, %v375
        %v391 = vadd.f32 %v390, %v379
        %v392 = vadd.f32 %v391, %v383
        %v393 = vrot.slane %v392, 4
        %v394 = vadd.f32 %v392, %v393
        %v395 = vrot.slane %v394, 2
        %v396 = vadd.f32 %v394, %v395
        %v397 = vrot.slane %v396, 1
        %v398 = vadd.f32 %v396, %v397
        %v399 = vadd.f32 %v357, %v361
        %v400 = vadd.f32 %v399, %v365
        %v401 = vadd.f32 %v400, %v369
        %v402 = vadd.f32 %v401, %v373
        %v403 = vadd.f32 %v402, %v377
        %v404 = vadd.f32 %v403, %v381
        %v405 = vadd.f32 %v404, %v385
        %v406 = vrot.slane %v405, 4
        %v407 = vadd.f32 %v405, %v406
        %v408 = vrot.slane %v407, 2
        %v409 = vadd.f32 %v407, %v408
        %v410 = vrot.slane %v409, 1
        %v411 = vadd.f32 %v409, %v410
        %v412 = vlog2.pop %v398
        %v413 = vmul.f32 %v412, 0.6931472
        %v414 = vlog2.pop %v411
        %v415 = vmul.f32 %v414, 0.6931472
        %v416 = vadd.f32 %v324, %v413
        %v417 = vadd.f32 %v337, %v415
        %v418 = vlaneseq
        %v419 = vshrl.u32 %v418, 7
        %v420 = vadd.s32 %v419, 8
        %v421 = vadd.s32 %v419, 16
        %v422 = vadd.s32 %v419, 24
        %v423 = vadd.s32 %v419, 32
        %v424 = vadd.s32 %v419, 40
        %v425 = vadd.s32 %v419, 48
        %v426 = vadd.s32 %v419, 56
        %v427 = vperm.slane %v310, 0
        %v428 = vperm.slane %v310, 1
        %vm429 = vcmp.eq.s32.totalorder %v419, %v427
        %vm430 = vcmp.eq.s32.totalorder %v419, %v428
        %vm431 = vcmp.eq.s32.totalorder %v420, %v427
        %vm432 = vcmp.eq.s32.totalorder %v420, %v428
        %vm433 = vcmp.eq.s32.totalorder %v421, %v427
        %vm434 = vcmp.eq.s32.totalorder %v421, %v428
        %vm435 = vcmp.eq.s32.totalorder %v422, %v427
        %vm436 = vcmp.eq.s32.totalorder %v422, %v428
        %vm437 = vcmp.eq.s32.totalorder %v423, %v427
        %vm438 = vcmp.eq.s32.totalorder %v423, %v428
        %vm439 = vcmp.eq.s32.totalorder %v424, %v427
        %vm440 = vcmp.eq.s32.totalorder %v424, %v428
        %vm441 = vcmp.eq.s32.totalorder %v425, %v427
        %vm442 = vcmp.eq.s32.totalorder %v425, %v428
        %vm443 = vcmp.eq.s32.totalorder %v426, %v427
        %vm444 = vcmp.eq.s32.totalorder %v426, %v428
        %v445 = vsel %vm429, %v294, 0.0
        %v446 = vsel %vm430, %v295, 0.0
        %v447 = vsel %vm431, %v296, 0.0
        %v448 = vsel %vm432, %v297, 0.0
        %v449 = vsel %vm433, %v298, 0.0
        %v450 = vsel %vm434, %v299, 0.0
        %v451 = vsel %vm435, %v300, 0.0
        %v452 = vsel %vm436, %v301, 0.0
        %v453 = vsel %vm437, %v302, 0.0
        %v454 = vsel %vm438, %v303, 0.0
        %v455 = vsel %vm439, %v304, 0.0
        %v456 = vsel %vm440, %v305, 0.0
        %v457 = vsel %vm441, %v306, 0.0
        %v458 = vsel %vm442, %v307, 0.0
        %v459 = vsel %vm443, %v308, 0.0
        %v460 = vsel %vm444, %v309, 0.0
        %v461 = vadd.f32 %v445, %v447
        %v462 = vadd.f32 %v461, %v449
        %v463 = vadd.f32 %v462, %v451
        %v464 = vadd.f32 %v463, %v453
        %v465 = vadd.f32 %v464, %v455
        %v466 = vadd.f32 %v465, %v457
        %v467 = vadd.f32 %v466, %v459
        %v468 = vrot.slane %v467, 4
        %v469 = vadd.f32 %v467, %v468
        %v470 = vrot.slane %v469, 2
        %v471 = vadd.f32 %v469, %v470
        %v472 = vrot.slane %v471, 1
        %v473 = vadd.f32 %v471, %v472
        %v474 = vadd.f32 %v446, %v448
        %v475 = vadd.f32 %v474, %v450
        %v476 = vadd.f32 %v475, %v452
        %v477 = vadd.f32 %v476, %v454
        %v478 = vadd.f32 %v477, %v456
        %v479 = vadd.f32 %v478, %v458
        %v480 = vadd.f32 %v479, %v460
        %v481 = vrot.slane %v480, 4
        %v482 = vadd.f32 %v480, %v481
        %v483 = vrot.slane %v482, 2
        %v484 = vadd.f32 %v482, %v483
        %v485 = vrot.slane %v484, 1
        %v486 = vadd.f32 %v484, %v485
        %v487 = vsub.f32 %v416, %v473
        %v488 = vsub.f32 %v417, %v486
        %v491 = vrot.slane %v488, 7
        %vm492 = vcmask 1040384
        %v493 = vsel %vm492, %v487, %v491
        %v495 = vsel %vm311, %v493, 0.0
        %v496 = vld [vmem:[%s270] sm:$0x3]
        %v497 = vadd.f32 %v496, %v495
        %v498 = vlaneseq
        %vm499 = vcmp.ge.s32.totalorder %v498, 0
        %vm500 = vcmp.lt.s32.totalorder %v498, 256
        %vm501 = vmand %vm499, %vm500
        %502 = vst.msk [vmem:[%s270] sm:$0x3] %vm501, %v497
        %v503 = vld [vmem:[%s277] sm:$0x3]
        %v504 = vsel %vm311, 1, 0
        %v505 = vcvt.s32.f32 %v504
        %v506 = vadd.f32 %v503, %v505
        %507 = vst.msk [vmem:[%s277] sm:$0x3] %vm501, %v506
        %s508 = sand.u32 %s116, 1
        %s509 = scalar_lea.sflag [#allocation4], %s508
        %s510 = sand.u32 %s116, 1
        %s511 = smul.addr %s510, 2
        %s512 = scalar_lea.vmem [#allocation7], %s511
        %s513 = sand.u32 %s144, 1
        %s514 = scalar_lea.sflag [#allocation9], %s513
        %s515 = sand.u32 %s144, 1
        %s516 = smul.addr %s515, 2
        %s517 = scalar_lea.vmem [#allocation8], %s516
        // Predicated region
        $region41: #{tpu_custom_call.1} parent=27 // pred_check
          %p518 = pneg %p126
        $region42: #{tpu_custom_call.1} parent=27 // pred_check_branch
          %520 = sbr.rel (%p518) target = $region44
        $region43: #{tpu_custom_call.1} parent=27 // pred_region
          %s521 = sadd.s32 %s32, %s33
          %523 = vsyncadd %s509, 0
          %s524 = smul.addr %s521, 2
          %s525 = scalar_lea.hbm %s2, %s524
          %s527 = sshll.u32 %s512, 4
          %s528 = int_to_ptr.vmem [resolvable:$true] %s527
          %s529 = sshll.u32 %s525, 4
          %s530 = int_to_ptr.hbm [resolvable:$true] %s529
          %532 = dma.vmem_to_hbm [thread:$0]  %s528, 32, %s530, %s509
        $region44: #{tpu_custom_call.1} parent=27 // pred_fallthru
          _
        // Predicated region
        $region45: #{tpu_custom_call.1} parent=27 // pred_check
          %p533 = pneg %p154
        $region46: #{tpu_custom_call.1} parent=27 // pred_check_branch
          %535 = sbr.rel (%p533) target = $region48
        $region47: #{tpu_custom_call.1} parent=27 // pred_region
          %s536 = sadd.s32 %s32, %s33
          %538 = vsyncadd %s514, 0
          %s539 = smul.addr %s536, 2
          %s540 = scalar_lea.hbm %s3, %s539
          %s542 = sshll.u32 %s517, 4
          %s543 = int_to_ptr.vmem [resolvable:$true] %s542
          %s544 = sshll.u32 %s540, 4
          %s545 = int_to_ptr.hbm [resolvable:$true] %s544
          %547 = dma.vmem_to_hbm [thread:$0]  %s543, 32, %s545, %s514
        $region48: #{tpu_custom_call.1} parent=27 // pred_fallthru
          _
      $region28: #{tpu_custom_call.1} parent=5 // pred_fallthru
        _
      %p548 = scmp.le.s32.totalorder 2, %s22
      // Predicated region
      $region49: #{tpu_custom_call.1} parent=5 // pred_check
        %p549 = pneg %p548
      $region50: #{tpu_custom_call.1} parent=5 // pred_check_branch
        %551 = sbr.rel (%p549) target = $region52
      $region51: #{tpu_custom_call.1} parent=5 // pred_region
        %s552 = ssub.s32 %s22, 2
        // Predicated region
        $region53: #{tpu_custom_call.1} parent=51 // pred_check
          %p553 = pneg %p132
        $region54: #{tpu_custom_call.1} parent=51 // pred_check_branch
          %555 = sbr.rel (%p553) target = $region56
        $region55: #{tpu_custom_call.1} parent=51 // pred_region
          %s556 = sand.u32 %s117, 1
          %s557 = scalar_lea.sflag [#allocation4], %s556
          %s558 = sand.u32 %s117, 1
          %s559 = smul.addr %s558, 2
          %s560 = scalar_lea.vmem [#allocation7], %s559
          %562 = dma.done %s557, 32
        $region56: #{tpu_custom_call.1} parent=51 // pred_fallthru
          _
        // Predicated region
        $region57: #{tpu_custom_call.1} parent=51 // pred_check
          %p563 = pneg %p160
        $region58: #{tpu_custom_call.1} parent=51 // pred_check_branch
          %565 = sbr.rel (%p563) target = $region60
        $region59: #{tpu_custom_call.1} parent=51 // pred_region
          %s566 = sand.u32 %s145, 1
          %s567 = scalar_lea.sflag [#allocation9], %s566
          %s568 = sand.u32 %s145, 1
          %s569 = smul.addr %s568, 2
          %s570 = scalar_lea.vmem [#allocation8], %s569
          %572 = dma.done %s567, 32
        $region60: #{tpu_custom_call.1} parent=51 // pred_fallthru
          _
      $region52: #{tpu_custom_call.1} parent=5 // pred_fallthru
        _
    $region6: #{tpu_custom_call.1} parent=1 // loop_footer
      %s26 = sadd.s32 1, %s22
    $region7: #{tpu_custom_call.1} parent=1 // loop_footer_branch
      %21 = sbr.rel target = $region3
    $region8: #{tpu_custom_call.1} parent=1 // loop_exit
      _
    %573 = vsyncpa [#allocation3], 1
    %s574 = scalar_lea.sflag [#allocation3], 1
    %575 = vsyncpa %s574, 1
    %576 = vsyncpa [#allocation6], 1
    %s577 = scalar_lea.sflag [#allocation6], 1
    %578 = vsyncpa %s577, 1
    %579 = vsyncpa [#allocation4], 1
    %s580 = scalar_lea.sflag [#allocation4], 1
    %581 = vsyncpa %s580, 1
    %582 = vsyncpa [#allocation9], 1
    %s583 = scalar_lea.sflag [#allocation9], 1
    %584 = vsyncpa %s583, 1

</llo_original>
